<compile_context>
chip_gen: v5e
topology: v5e:2x2
jax: 0.10.0
libtpu: 0.0.40
codegen_flags: <defaults>
</compile_context>

<pallas_src>
import functools

import jax
import jax.numpy as jnp
from jax.experimental import pallas as pl
from jax.experimental.pallas import tpu as pltpu

IN_F = 5
IN_AUG = IN_F + 1          # +1 ones-row that folds b1 into the layer-1 matmul
HID_F = 1024
OUT_F = 4
HC = 256                   # hidden-dim chunk (multiple of 8 and 128)


def _round_up(n, m):
    return ((n + m - 1) // m) * m


def _mlp_kernel(xT_ref, w1_ref, w2_ref, b2_ref, oT_ref):
    # xT : [6, TB]      (rows 0..4 = x.T, row 5 = ones -> folds b1)
    # w1 : [1024, 6]    (= concat(net1.weight, net1.bias[:, None]))
    # w2 : [4, 1024]
    # b2 : [4, 1]
    # oT : [4, TB]
    xT = xT_ref[...]
    acc = jnp.zeros(oT_ref.shape, jnp.float32)
    # Chunk the hidden dim: each relu'd [HC, TB] slab is consumed by the
    # layer-2 matmul immediately instead of materializing [1024, TB].
    # Static trip count (4) with static slices -> zero-cost ref views.
    for c in range(HID_F // HC):
        h0 = c * HC
        hTc = jnp.dot(w1_ref[h0:h0 + HC, :], xT,
                      preferred_element_type=jnp.float32)      # [HC, TB]
        hTc = jnp.maximum(hTc, 0.0)                             # ReLU (bias folded)
        acc = acc + jnp.dot(w2_ref[:, h0:h0 + HC], hTc,
                            preferred_element_type=jnp.float32)  # [4, TB]
    oT_ref[...] = (acc + b2_ref[...]).astype(oT_ref.dtype)


@functools.partial(jax.jit, static_argnames=("tb",))
def dummy_mlp_forward(x, w1, b1, w2, b2, *, tb=2048):
    """DummyMLP forward: relu(x @ w1.T + b1) @ w2.T + b2.

    x: [B, 5]; w1: [1024, 5]; b1: [1024]; w2: [4, 1024]; b2: [4]
    (PyTorch nn.Linear convention: weight is [out_features, in_features]).
    """
    B = x.shape[0]

    # Don't over-pad small batches; lane dim of a block must be a 128-multiple.
    tb_eff = min(tb, _round_up(max(B, 1), 128))
    n_blocks = pl.cdiv(B, tb_eff)
    # v7x has two TensorCores: prefer an even number of "parallel" grid steps.
    if n_blocks > 1 and n_blocks % 2 == 1:
        tb_eff = _round_up(pl.cdiv(B, n_blocks + 1), 128)
        n_blocks = pl.cdiv(B, tb_eff)
    Bp = n_blocks * tb_eff

    x32 = jnp.asarray(x, jnp.float32)
    if Bp != B:
        # Pad on the batch axis BEFORE the transpose (one relayout copy).
        x32 = jnp.pad(x32, ((0, Bp - B), (0, 0)))
    # Explicit ones column (do NOT rely on implicit padding), then batch->lanes.
    x_aug = jnp.concatenate([x32, jnp.ones((Bp, 1), jnp.float32)], axis=1)  # [Bp, 6]
    xT = x_aug.T                                                            # [6, Bp]

    w1_aug = jnp.concatenate(
        [jnp.asarray(w1, jnp.float32),
         jnp.asarray(b1, jnp.float32).reshape(HID_F, 1)], axis=1)           # [1024, 6]
    w2f = jnp.asarray(w2, jnp.float32)                                      # [4, 1024]
    b2c = jnp.asarray(b2, jnp.float32).reshape(OUT_F, 1)                    # [4, 1]

    def resident(shape):
        # Constant index_map -> DMA'd once, stays resident in VMEM.
        return pl.BlockSpec(shape, lambda i: (0, 0))

    oT = pl.pallas_call(
        _mlp_kernel,
        out_shape=jax.ShapeDtypeStruct((OUT_F, Bp), jnp.float32),
        grid=(n_blocks,),
        in_specs=[
            pl.BlockSpec((IN_AUG, tb_eff), lambda i: (0, i)),   # x tile (batch on lanes)
            resident((HID_F, IN_AUG)),                          # w1_aug
            resident((OUT_F, HID_F)),                           # w2
            resident((OUT_F, 1)),                               # b2
        ],
        out_specs=pl.BlockSpec((OUT_F, tb_eff), lambda i: (0, i)),
        compiler_params=pltpu.CompilerParams(
            dimension_semantics=("parallel",),                  # shard batch across TCs
            vmem_limit_bytes=32 * 1024 * 1024,                  # safe on v5e/v6e/v7x
        ),
    )(xT, w1_aug, w2f, b2c)

    return oT[:, :B].T                                          # [B, 4]


def dummy_mlp_reference(x, w1, b1, w2, b2):
    h = jnp.maximum(x @ w1.T + b1, 0.0)
    return h @ w2.T + b2


if __name__ == "__main__":
    key = jax.random.PRNGKey(0)
    B = 8
    x = jax.random.normal(key, (B, IN_F), dtype=jnp.float32)

    # Deterministic parameters matching DummyMLP.reset_parameters():
    #   net1.weight = 0.5, net1.bias = 1.5, net2.weight = 1.0, net2.bias = 1.2
    w1 = jnp.full((HID_F, IN_F), 0.5, dtype=jnp.float32)
    b1 = jnp.full((HID_F,), 1.5, dtype=jnp.float32)
    w2 = jnp.full((OUT_F, HID_F), 1.0, dtype=jnp.float32)
    b2 = jnp.full((OUT_F,), 1.2, dtype=jnp.float32)

    out = jax.block_until_ready(dummy_mlp_forward(x, w1, b1, w2, b2))
    ref = dummy_mlp_reference(x, w1, b1, w2, b2)

    assert out.shape == (B, OUT_F), out.shape
    assert jnp.allclose(out, ref, rtol=1e-5, atol=1e-3), (out, ref)
    print("KERNEL_OK")
</pallas_src>

<mosaic_0001>
module attributes {stable_mosaic.version = 11 : i64} {
  func.func @_mlp_kernel(%arg0: i32, %arg1: memref<6x128xf32, #tpu.memory_space<vmem>>, %arg2: memref<1024x6xf32, #tpu.memory_space<vmem>>, %arg3: memref<4x1024xf32, #tpu.memory_space<vmem>>, %arg4: memref<4x1xf32, #tpu.memory_space<vmem>>, %arg5: memref<4x128xf32, #tpu.memory_space<vmem>>) attributes {dimension_semantics = [#tpu.dimension_semantics<parallel>], iteration_bounds = array<i64: 1>, scalar_prefetch = 0 : i64, scratch_operands = 0 : i64, tpu.core_type = #tpu.core_type<tc>, window_params = [{transform_indices = @transform_0, window_bounds = array<i64: 6, 128>}, {pipeline_mode = #tpu.pipeline_mode<synchronous>, transform_indices = @transform_1, window_bounds = array<i64: 1024, 6>}, {pipeline_mode = #tpu.pipeline_mode<synchronous>, transform_indices = @transform_2, window_bounds = array<i64: 4, 1024>}, {pipeline_mode = #tpu.pipeline_mode<synchronous>, transform_indices = @transform_3, window_bounds = array<i64: 4, 1>}, {transform_indices = @transform_4, window_bounds = array<i64: 4, 128>}]} {
    %c0 = arith.constant 0 : index
    %c0_0 = arith.constant 0 : index
    %0 = vector.load %arg1[%c0, %c0_0] : memref<6x128xf32, #tpu.memory_space<vmem>>, vector<6x128xf32>
    %cst = arith.constant 0.000000e+00 : f32
    %1 = vector.broadcast %cst : f32 to vector<4x128xf32>
    %c0_1 = arith.constant 0 : index
    %c0_2 = arith.constant 0 : index
    %2 = vector.load %arg2[%c0_1, %c0_2] : memref<1024x6xf32, #tpu.memory_space<vmem>>, vector<256x6xf32>
    %cst_3 = arith.constant dense<0.000000e+00> : vector<256x128xf32>
    %3 = tpu.matmul %2, %0, %cst_3 {dimension_numbers = #tpu.dot_dimension_numbers<[1], [0], [0], [1], [0, 0, 1, 1], [], []>} : vector<256x6xf32>, vector<6x128xf32>, vector<256x128xf32> -> vector<256x128xf32>
    %cst_4 = arith.constant 0.000000e+00 : f32
    %4 = vector.broadcast %cst_4 : f32 to vector<256x128xf32>
    %5 = arith.maximumf %3, %4 : vector<256x128xf32>
    %c0_5 = arith.constant 0 : index
    %c0_6 = arith.constant 0 : index
    %6 = vector.load %arg3[%c0_5, %c0_6] : memref<4x1024xf32, #tpu.memory_space<vmem>>, vector<4x256xf32>
    %cst_7 = arith.constant dense<0.000000e+00> : vector<4x128xf32>
    %7 = tpu.matmul %6, %5, %cst_7 {dimension_numbers = #tpu.dot_dimension_numbers<[1], [0], [0], [1], [0, 0, 1, 1], [], []>} : vector<4x256xf32>, vector<256x128xf32>, vector<4x128xf32> -> vector<4x128xf32>
    %8 = arith.addf %1, %7 : vector<4x128xf32>
    %c256 = arith.constant 256 : index
    %c0_8 = arith.constant 0 : index
    %9 = vector.load %arg2[%c256, %c0_8] : memref<1024x6xf32, #tpu.memory_space<vmem>>, vector<256x6xf32>
    %cst_9 = arith.constant dense<0.000000e+00> : vector<256x128xf32>
    %10 = tpu.matmul %9, %0, %cst_9 {dimension_numbers = #tpu.dot_dimension_numbers<[1], [0], [0], [1], [0, 0, 1, 1], [], []>} : vector<256x6xf32>, vector<6x128xf32>, vector<256x128xf32> -> vector<256x128xf32>
    %cst_10 = arith.constant 0.000000e+00 : f32
    %11 = vector.broadcast %cst_10 : f32 to vector<256x128xf32>
    %12 = arith.maximumf %10, %11 : vector<256x128xf32>
    %c0_11 = arith.constant 0 : index
    %c256_12 = arith.constant 256 : index
    %13 = vector.load %arg3[%c0_11, %c256_12] : memref<4x1024xf32, #tpu.memory_space<vmem>>, vector<4x256xf32>
    %cst_13 = arith.constant dense<0.000000e+00> : vector<4x128xf32>
    %14 = tpu.matmul %13, %12, %cst_13 {dimension_numbers = #tpu.dot_dimension_numbers<[1], [0], [0], [1], [0, 0, 1, 1], [], []>} : vector<4x256xf32>, vector<256x128xf32>, vector<4x128xf32> -> vector<4x128xf32>
    %15 = arith.addf %8, %14 : vector<4x128xf32>
    %c512 = arith.constant 512 : index
    %c0_14 = arith.constant 0 : index
    %16 = vector.load %arg2[%c512, %c0_14] : memref<1024x6xf32, #tpu.memory_space<vmem>>, vector<256x6xf32>
    %cst_15 = arith.constant dense<0.000000e+00> : vector<256x128xf32>
    %17 = tpu.matmul %16, %0, %cst_15 {dimension_numbers = #tpu.dot_dimension_numbers<[1], [0], [0], [1], [0, 0, 1, 1], [], []>} : vector<256x6xf32>, vector<6x128xf32>, vector<256x128xf32> -> vector<256x128xf32>
    %cst_16 = arith.constant 0.000000e+00 : f32
    %18 = vector.broadcast %cst_16 : f32 to vector<256x128xf32>
    %19 = arith.maximumf %17, %18 : vector<256x128xf32>
    %c0_17 = arith.constant 0 : index
    %c512_18 = arith.constant 512 : index
    %20 = vector.load %arg3[%c0_17, %c512_18] : memref<4x1024xf32, #tpu.memory_space<vmem>>, vector<4x256xf32>
    %cst_19 = arith.constant dense<0.000000e+00> : vector<4x128xf32>
    %21 = tpu.matmul %20, %19, %cst_19 {dimension_numbers = #tpu.dot_dimension_numbers<[1], [0], [0], [1], [0, 0, 1, 1], [], []>} : vector<4x256xf32>, vector<256x128xf32>, vector<4x128xf32> -> vector<4x128xf32>
    %22 = arith.addf %15, %21 : vector<4x128xf32>
    %c768 = arith.constant 768 : index
    %c0_20 = arith.constant 0 : index
    %23 = vector.load %arg2[%c768, %c0_20] : memref<1024x6xf32, #tpu.memory_space<vmem>>, vector<256x6xf32>
    %cst_21 = arith.constant dense<0.000000e+00> : vector<256x128xf32>
    %24 = tpu.matmul %23, %0, %cst_21 {dimension_numbers = #tpu.dot_dimension_numbers<[1], [0], [0], [1], [0, 0, 1, 1], [], []>} : vector<256x6xf32>, vector<6x128xf32>, vector<256x128xf32> -> vector<256x128xf32>
    %cst_22 = arith.constant 0.000000e+00 : f32
    %25 = vector.broadcast %cst_22 : f32 to vector<256x128xf32>
    %26 = arith.maximumf %24, %25 : vector<256x128xf32>
    %c0_23 = arith.constant 0 : index
    %c768_24 = arith.constant 768 : index
    %27 = vector.load %arg3[%c0_23, %c768_24] : memref<4x1024xf32, #tpu.memory_space<vmem>>, vector<4x256xf32>
    %cst_25 = arith.constant dense<0.000000e+00> : vector<4x128xf32>
    %28 = tpu.matmul %27, %26, %cst_25 {dimension_numbers = #tpu.dot_dimension_numbers<[1], [0], [0], [1], [0, 0, 1, 1], [], []>} : vector<4x256xf32>, vector<256x128xf32>, vector<4x128xf32> -> vector<4x128xf32>
    %29 = arith.addf %22, %28 : vector<4x128xf32>
    %c0_26 = arith.constant 0 : index
    %c0_27 = arith.constant 0 : index
    %30 = vector.load %arg4[%c0_26, %c0_27] : memref<4x1xf32, #tpu.memory_space<vmem>>, vector<4x1xf32>
    %31 = vector.broadcast %30 : vector<4x1xf32> to vector<4x128xf32>
    %32 = arith.addf %29, %31 : vector<4x128xf32>
    %c0_28 = arith.constant 0 : index
    %c0_29 = arith.constant 0 : index
    %33 = vector.load %arg5[%c0_28, %c0_29] : memref<4x128xf32, #tpu.memory_space<vmem>>, vector<4x128xf32>
    tpu.vector_store %arg5[%c0_28, %c0_29], %32 {strides = array<i32>} : memref<4x128xf32, #tpu.memory_space<vmem>>, vector<4x128xf32>,
    return
  }
  func.func @transform_0(%arg0: i32) -> (i32, i32) {
    %c0_i32 = arith.constant 0 : i32
    %c0_i32_0 = arith.constant 0 : i32
    return %c0_i32, %arg0 : i32, i32
  }
  func.func @transform_1(%arg0: i32) -> (i32, i32) {
    %c0_i32 = arith.constant 0 : i32
    %c0_i32_0 = arith.constant 0 : i32
    %c0_i32_1 = arith.constant 0 : i32
    return %c0_i32, %c0_i32_0 : i32, i32
  }
  func.func @transform_2(%arg0: i32) -> (i32, i32) {
    %c0_i32 = arith.constant 0 : i32
    %c0_i32_0 = arith.constant 0 : i32
    %c0_i32_1 = arith.constant 0 : i32
    return %c0_i32, %c0_i32_0 : i32, i32
  }
  func.func @transform_3(%arg0: i32) -> (i32, i32) {
    %c0_i32 = arith.constant 0 : i32
    %c0_i32_0 = arith.constant 0 : i32
    %c0_i32_1 = arith.constant 0 : i32
    return %c0_i32, %c0_i32_0 : i32, i32
  }
  func.func @transform_4(%arg0: i32) -> (i32, i32) {
    %c0_i32 = arith.constant 0 : i32
    %c0_i32_0 = arith.constant 0 : i32
    return %c0_i32, %arg0 : i32, i32
  }
}

</mosaic_0001>

<llo_original>
// kernel: dummy_mlp_forward.1
$region0: #{dummy_mlp_forward.1}
  #allocation0 [shape = 'u32[]', space=smem, size = 0x4, offset = 0x4, fixed_abs, tag = 'smem constant byte address 0x4 - core index']
  #allocation1 [shape = 'u32[72,128]{1,0:T(1,128)}', space=vmem, size = 0x9000, scoped, tag = 'internal scratch']
  %s0 = inlined_call_operand.vmem [shape: f32[6,128], index: 0, kind: input, shape index: {}]
  %s1 = inlined_call_operand.vmem [shape: f32[1024,6], index: 1, kind: input, shape index: {}]
  %s2 = inlined_call_operand.vmem [shape: f32[4,1024], index: 2, kind: input, shape index: {}]
  %s3 = inlined_call_operand.vmem [shape: f32[4,1], index: 3, kind: input, shape index: {}]
  %s4 = inlined_call_operand.vmem [shape: f32[4,128], index: 4, kind: output, shape index: {}]
  %s5 = sld [smem:[#allocation0]]
  $region26: #{dummy_mlp_forward.1} parent=0
    _
  %s7 = ssub.s32 1, %s5
  %s8 = scalar_select 0, %s7, %s5
  // Predicated region
  $region2: #{dummy_mlp_forward.1} parent=0 // pred_check
    _
  $region3: #{dummy_mlp_forward.1} parent=0 // pred_check_branch
    %10 = sbr.rel (0) target = $region5
  $region4: #{dummy_mlp_forward.1} parent=0 // pred_region
    _
  $region5: #{dummy_mlp_forward.1} parent=0 // pred_fallthru
    _
  // Predicated region
  $region6: #{dummy_mlp_forward.1} parent=0 // pred_check
    _
  $region7: #{dummy_mlp_forward.1} parent=0 // pred_check_branch
    %12 = sbr.rel (0) target = $region9
  $region8: #{dummy_mlp_forward.1} parent=0 // pred_region
    _
  $region9: #{dummy_mlp_forward.1} parent=0 // pred_fallthru
    _
  // Predicated region
  $region10: #{dummy_mlp_forward.1} parent=0 // pred_check
    _
  $region11: #{dummy_mlp_forward.1} parent=0 // pred_check_branch
    %14 = sbr.rel (0) target = $region13
  $region12: #{dummy_mlp_forward.1} parent=0 // pred_region
    _
  $region13: #{dummy_mlp_forward.1} parent=0 // pred_fallthru
    _
  // Predicated region
  $region14: #{dummy_mlp_forward.1} parent=0 // pred_check
    _
  $region15: #{dummy_mlp_forward.1} parent=0 // pred_check_branch
    %16 = sbr.rel (0) target = $region17
  $region16: #{dummy_mlp_forward.1} parent=0 // pred_region
    _
  $region17: #{dummy_mlp_forward.1} parent=0 // pred_fallthru
    _
  %v17 = vld [vmem:[%s0] sm:$0x3f]
  %v18 = vld [vmem:[%s1] sm:$0xff]
  %v19 = vld [vmem:[%s1 + $0x8] sm:$0xff]
  %v20 = vld [vmem:[%s1 + $0x10] sm:$0xff]
  %v21 = vld [vmem:[%s1 + $0x18] sm:$0xff]
  %v22 = vld [vmem:[%s1 + $0x20] sm:$0xff]
  %v23 = vld [vmem:[%s1 + $0x28] sm:$0xff]
  %v24 = vld [vmem:[%s1 + $0x30] sm:$0xff]
  %v25 = vld [vmem:[%s1 + $0x38] sm:$0xff]
  %v26 = vld [vmem:[%s1 + $0x40] sm:$0xff]
  %v27 = vld [vmem:[%s1 + $0x48] sm:$0xff]
  %v28 = vld [vmem:[%s1 + $0x50] sm:$0xff]
  %v29 = vld [vmem:[%s1 + $0x58] sm:$0xff]
  %v30 = vld [vmem:[%s1 + $0x60] sm:$0xff]
  %v31 = vld [vmem:[%s1 + $0x68] sm:$0xff]
  %v32 = vld [vmem:[%s1 + $0x70] sm:$0xff]
  %v33 = vld [vmem:[%s1 + $0x78] sm:$0xff]
  %v34 = vld [vmem:[%s1 + $0x80] sm:$0xff]
  %v35 = vld [vmem:[%s1 + $0x88] sm:$0xff]
  %v36 = vld [vmem:[%s1 + $0x90] sm:$0xff]
  %v37 = vld [vmem:[%s1 + $0x98] sm:$0xff]
  %v38 = vld [vmem:[%s1 + $0xa0] sm:$0xff]
  %v39 = vld [vmem:[%s1 + $0xa8] sm:$0xff]
  %v40 = vld [vmem:[%s1 + $0xb0] sm:$0xff]
  %v41 = vld [vmem:[%s1 + $0xb8] sm:$0xff]
  %v42 = vld [vmem:[%s1 + $0xc0] sm:$0xff]
  %v43 = vld [vmem:[%s1 + $0xc8] sm:$0xff]
  %v44 = vld [vmem:[%s1 + $0xd0] sm:$0xff]
  %v45 = vld [vmem:[%s1 + $0xd8] sm:$0xff]
  %v46 = vld [vmem:[%s1 + $0xe0] sm:$0xff]
  %v47 = vld [vmem:[%s1 + $0xe8] sm:$0xff]
  %v48 = vld [vmem:[%s1 + $0xf0] sm:$0xff]
  %v49 = vld [vmem:[%s1 + $0xf8] sm:$0xff]
  %vm50 = vcmask 48128
  %v52 = vsel %vm50, %v18, 0
  %v55 = vsel %vm50, %v19, 0
  %v58 = vsel %vm50, %v20, 0
  %v61 = vsel %vm50, %v21, 0
  %v64 = vsel %vm50, %v22, 0
  %v67 = vsel %vm50, %v23, 0
  %v70 = vsel %vm50, %v24, 0
  %v73 = vsel %vm50, %v25, 0
  %v76 = vsel %vm50, %v26, 0
  %v79 = vsel %vm50, %v27, 0
  %v82 = vsel %vm50, %v28, 0
  %v85 = vsel %vm50, %v29, 0
  %v88 = vsel %vm50, %v30, 0
  %v91 = vsel %vm50, %v31, 0
  %v94 = vsel %vm50, %v32, 0
  %v97 = vsel %vm50, %v33, 0
  %v100 = vsel %vm50, %v34, 0
  %v103 = vsel %vm50, %v35, 0
  %v106 = vsel %vm50, %v36, 0
  %v109 = vsel %vm50, %v37, 0
  %v112 = vsel %vm50, %v38, 0
  %v115 = vsel %vm50, %v39, 0
  %v118 = vsel %vm50, %v40, 0
  %v121 = vsel %vm50, %v41, 0
  %v124 = vsel %vm50, %v42, 0
  %v127 = vsel %vm50, %v43, 0
  %v130 = vsel %vm50, %v44, 0
  %v133 = vsel %vm50, %v45, 0
  %v136 = vsel %vm50, %v46, 0
  %v139 = vsel %vm50, %v47, 0
  %v142 = vsel %vm50, %v48, 0
  %v145 = vsel %vm50, %v49, 0
  %vm147 = vcmask 1045504
  %v149 = vsel %vm147, %v17, 0
  %151 = vmatpush.msra.mxu0 0.0
  %152 = vmatpush.msra.mxu0 0.0
  %153 = vmatpush.msra.mxu0 0.0
  %154 = vmatpush.msra.mxu0 0.0
  %155 = vmatpush.msra.mxu0 0.0
  %156 = vmatpush.msra.mxu0 0.0
  %157 = vmatpush.msra.mxu0 0.0
  %158 = vmatpush.msra.mxu0 0.0
  %159 = vmatpush.msra.mxu0 0.0
  %160 = vmatpush.msra.mxu0 0.0
  %161 = vmatpush.msra.mxu0 0.0
  %162 = vmatpush.msra.mxu0 0.0
  %163 = vmatpush.msra.mxu0 0.0
  %164 = vmatpush.msra.mxu0 0.0
  %165 = vmatpush.msra.mxu0 0.0
  %166 = vmatpush.msra.mxu0 %v149
  %167 = vmatmul.f32.gmra.mxu0 %v52
  %v168 = vpop.f32.mrf.mxu0
  %v169 = vadd.f32 0.0, %v168
  %170 = vmatmul.f32.gmra.mxu0 %v55
  %v171 = vpop.f32.mrf.mxu0
  %v172 = vadd.f32 0.0, %v171
  %173 = vmatmul.f32.gmra.mxu0 %v58
  %v174 = vpop.f32.mrf.mxu0
  %v175 = vadd.f32 0.0, %v174
  %176 = vmatmul.f32.gmra.mxu0 %v61
  %v177 = vpop.f32.mrf.mxu0
  %v178 = vadd.f32 0.0, %v177
  %179 = vmatmul.f32.gmra.mxu0 %v64
  %v180 = vpop.f32.mrf.mxu0
  %v181 = vadd.f32 0.0, %v180
  %182 = vmatmul.f32.gmra.mxu0 %v67
  %v183 = vpop.f32.mrf.mxu0
  %v184 = vadd.f32 0.0, %v183
  %185 = vmatmul.f32.gmra.mxu0 %v70
  %v186 = vpop.f32.mrf.mxu0
  %v187 = vadd.f32 0.0, %v186
  %188 = vmatmul.f32.gmra.mxu0 %v73
  %v189 = vpop.f32.mrf.mxu0
  %v190 = vadd.f32 0.0, %v189
  %191 = vmatmul.f32.gmra.mxu0 %v76
  %v192 = vpop.f32.mrf.mxu0
  %v193 = vadd.f32 0.0, %v192
  %194 = vmatmul.f32.gmra.mxu0 %v79
  %v195 = vpop.f32.mrf.mxu0
  %v196 = vadd.f32 0.0, %v195
  %197 = vmatmul.f32.gmra.mxu0 %v82
  %v198 = vpop.f32.mrf.mxu0
  %v199 = vadd.f32 0.0, %v198
  %200 = vmatmul.f32.gmra.mxu0 %v85
  %v201 = vpop.f32.mrf.mxu0
  %v202 = vadd.f32 0.0, %v201
  %203 = vmatmul.f32.gmra.mxu0 %v88
  %v204 = vpop.f32.mrf.mxu0
  %v205 = vadd.f32 0.0, %v204
  %206 = vmatmul.f32.gmra.mxu0 %v91
  %v207 = vpop.f32.mrf.mxu0
  %v208 = vadd.f32 0.0, %v207
  %209 = vmatmul.f32.gmra.mxu0 %v94
  %v210 = vpop.f32.mrf.mxu0
  %v211 = vadd.f32 0.0, %v210
  %212 = vmatmul.f32.gmra.mxu0 %v97
  %v213 = vpop.f32.mrf.mxu0
  %v214 = vadd.f32 0.0, %v213
  %215 = vmatmul.f32.gmra.mxu0 %v100
  %v216 = vpop.f32.mrf.mxu0
  %v217 = vadd.f32 0.0, %v216
  %218 = vmatmul.f32.gmra.mxu0 %v103
  %v219 = vpop.f32.mrf.mxu0
  %v220 = vadd.f32 0.0, %v219
  %221 = vmatmul.f32.gmra.mxu0 %v106
  %v222 = vpop.f32.mrf.mxu0
  %v223 = vadd.f32 0.0, %v222
  %224 = vmatmul.f32.gmra.mxu0 %v109
  %v225 = vpop.f32.mrf.mxu0
  %v226 = vadd.f32 0.0, %v225
  %227 = vmatmul.f32.gmra.mxu0 %v112
  %v228 = vpop.f32.mrf.mxu0
  %v229 = vadd.f32 0.0, %v228
  %230 = vmatmul.f32.gmra.mxu0 %v115
  %v231 = vpop.f32.mrf.mxu0
  %v232 = vadd.f32 0.0, %v231
  %233 = vmatmul.f32.gmra.mxu0 %v118
  %v234 = vpop.f32.mrf.mxu0
  %v235 = vadd.f32 0.0, %v234
  %236 = vmatmul.f32.gmra.mxu0 %v121
  %v237 = vpop.f32.mrf.mxu0
  %v238 = vadd.f32 0.0, %v237
  %239 = vmatmul.f32.gmra.mxu0 %v124
  %v240 = vpop.f32.mrf.mxu0
  %v241 = vadd.f32 0.0, %v240
  %242 = vmatmul.f32.gmra.mxu0 %v127
  %v243 = vpop.f32.mrf.mxu0
  %v244 = vadd.f32 0.0, %v243
  %245 = vmatmul.f32.gmra.mxu0 %v130
  %v246 = vpop.f32.mrf.mxu0
  %v247 = vadd.f32 0.0, %v246
  %248 = vmatmul.f32.gmra.mxu0 %v133
  %v249 = vpop.f32.mrf.mxu0
  %v250 = vadd.f32 0.0, %v249
  %251 = vmatmul.f32.gmra.mxu0 %v136
  %v252 = vpop.f32.mrf.mxu0
  %v253 = vadd.f32 0.0, %v252
  %254 = vmatmul.f32.gmra.mxu0 %v139
  %v255 = vpop.f32.mrf.mxu0
  %v256 = vadd.f32 0.0, %v255
  %257 = vmatmul.f32.gmra.mxu0 %v142
  %v258 = vpop.f32.mrf.mxu0
  %v259 = vadd.f32 0.0, %v258
  %260 = vmatmul.f32.gmra.mxu0 %v145
  %v261 = vpop.f32.mrf.mxu0
  %v262 = vadd.f32 0.0, %v261
  %263 = vdwg.mxu0
  %v264 = vmax.f32 %v169, 0.0
  %v265 = vmax.f32 %v172, 0.0
  %v266 = vmax.f32 %v175, 0.0
  %v267 = vmax.f32 %v178, 0.0
  %v268 = vmax.f32 %v181, 0.0
  %v269 = vmax.f32 %v184, 0.0
  %v270 = vmax.f32 %v187, 0.0
  %v271 = vmax.f32 %v190, 0.0
  %v272 = vmax.f32 %v193, 0.0
  %v273 = vmax.f32 %v196, 0.0
  %v274 = vmax.f32 %v199, 0.0
  %v275 = vmax.f32 %v202, 0.0
  %v276 = vmax.f32 %v205, 0.0
  %v277 = vmax.f32 %v208, 0.0
  %v278 = vmax.f32 %v211, 0.0
  %v279 = vmax.f32 %v214, 0.0
  %v280 = vmax.f32 %v217, 0.0
  %v281 = vmax.f32 %v220, 0.0
  %v282 = vmax.f32 %v223, 0.0
  %v283 = vmax.f32 %v226, 0.0
  %v284 = vmax.f32 %v229, 0.0
  %v285 = vmax.f32 %v232, 0.0
  %v286 = vmax.f32 %v235, 0.0
  %v287 = vmax.f32 %v238, 0.0
  %v288 = vmax.f32 %v241, 0.0
  %v289 = vmax.f32 %v244, 0.0
  %v290 = vmax.f32 %v247, 0.0
  %v291 = vmax.f32 %v250, 0.0
  %v292 = vmax.f32 %v253, 0.0
  %v293 = vmax.f32 %v256, 0.0
  %v294 = vmax.f32 %v259, 0.0
  %v295 = vmax.f32 %v262, 0.0
  %v296 = vld [vmem:[%s2] sm:$0xff]
  %v297 = vld [vmem:[%s1 + $0x100] sm:$0xff]
  %v298 = vld [vmem:[%s1 + $0x108] sm:$0xff]
  %v299 = vld [vmem:[%s1 + $0x110] sm:$0xff]
  %v300 = vld [vmem:[%s1 + $0x118] sm:$0xff]
  %v301 = vld [vmem:[%s1 + $0x120] sm:$0xff]
  %v302 = vld [vmem:[%s1 + $0x128] sm:$0xff]
  %v303 = vld [vmem:[%s1 + $0x130] sm:$0xff]
  %v304 = vld [vmem:[%s1 + $0x138] sm:$0xff]
  %v305 = vld [vmem:[%s1 + $0x140] sm:$0xff]
  %v306 = vld [vmem:[%s1 + $0x148] sm:$0xff]
  %v307 = vld [vmem:[%s1 + $0x150] sm:$0xff]
  %v308 = vld [vmem:[%s1 + $0x158] sm:$0xff]
  %v309 = vld [vmem:[%s1 + $0x160] sm:$0xff]
  %v310 = vld [vmem:[%s1 + $0x168] sm:$0xff]
  %v311 = vld [vmem:[%s1 + $0x170] sm:$0xff]
  %v312 = vld [vmem:[%s1 + $0x178] sm:$0xff]
  %v313 = vld [vmem:[%s1 + $0x180] sm:$0xff]
  %v314 = vld [vmem:[%s1 + $0x188] sm:$0xff]
  %v315 = vld [vmem:[%s1 + $0x190] sm:$0xff]
  %v316 = vld [vmem:[%s1 + $0x198] sm:$0xff]
  %v317 = vld [vmem:[%s1 + $0x1a0] sm:$0xff]
  %v318 = vld [vmem:[%s1 + $0x1a8] sm:$0xff]
  %v319 = vld [vmem:[%s1 + $0x1b0] sm:$0xff]
  %v320 = vld [vmem:[%s1 + $0x1b8] sm:$0xff]
  %v321 = vld [vmem:[%s1 + $0x1c0] sm:$0xff]
  %v322 = vld [vmem:[%s1 + $0x1c8] sm:$0xff]
  %v323 = vld [vmem:[%s1 + $0x1d0] sm:$0xff]
  %v324 = vld [vmem:[%s1 + $0x1d8] sm:$0xff]
  %v325 = vld [vmem:[%s1 + $0x1e0] sm:$0xff]
  %v326 = vld [vmem:[%s1 + $0x1e8] sm:$0xff]
  %v327 = vld [vmem:[%s1 + $0x1f0] sm:$0xff]
  %v328 = vld [vmem:[%s1 + $0x1f8] sm:$0xff]
  %v330 = vsel %vm50, %v297, 0
  %v333 = vsel %vm50, %v298, 0
  %v336 = vsel %vm50, %v299, 0
  %v339 = vsel %vm50, %v300, 0
  %v342 = vsel %vm50, %v301, 0
  %v345 = vsel %vm50, %v302, 0
  %v348 = vsel %vm50, %v303, 0
  %v351 = vsel %vm50, %v304, 0
  %v354 = vsel %vm50, %v305, 0
  %v357 = vsel %vm50, %v306, 0
  %v360 = vsel %vm50, %v307, 0
  %v363 = vsel %vm50, %v308, 0
  %v366 = vsel %vm50, %v309, 0
  %v369 = vsel %vm50, %v310, 0
  %v372 = vsel %vm50, %v311, 0
  %v375 = vsel %vm50, %v312, 0
  %v378 = vsel %vm50, %v313, 0
  %v381 = vsel %vm50, %v314, 0
  %v384 = vsel %vm50, %v315, 0
  %v387 = vsel %vm50, %v316, 0
  %v390 = vsel %vm50, %v317, 0
  %v393 = vsel %vm50, %v318, 0
  %v396 = vsel %vm50, %v319, 0
  %v399 = vsel %vm50, %v320, 0
  %v402 = vsel %vm50, %v321, 0
  %v405 = vsel %vm50, %v322, 0
  %v408 = vsel %vm50, %v323, 0
  %v411 = vsel %vm50, %v324, 0
  %v414 = vsel %vm50, %v325, 0
  %v417 = vsel %vm50, %v326, 0
  %v420 = vsel %vm50, %v327, 0
  %v423 = vsel %vm50, %v328, 0
  %425 = vmatpush.msra.mxu0 0.0
  %426 = vmatpush.msra.mxu0 0.0
  %427 = vmatpush.msra.mxu0 0.0
  %428 = vmatpush.msra.mxu0 0.0
  %429 = vmatpush.msra.mxu0 0.0
  %430 = vmatpush.msra.mxu0 0.0
  %431 = vmatpush.msra.mxu0 0.0
  %432 = vmatpush.msra.mxu0 0.0
  %433 = vmatpush.msra.mxu0 0.0
  %434 = vmatpush.msra.mxu0 0.0
  %435 = vmatpush.msra.mxu0 0.0
  %436 = vmatpush.msra.mxu0 0.0
  %437 = vmatpush.msra.mxu0 0.0
  %438 = vmatpush.msra.mxu0 0.0
  %439 = vmatpush.msra.mxu0 0.0
  %440 = vmatpush.msra.mxu0 %v149
  %441 = vmatmul.f32.gmra.mxu0 %v330
  %v442 = vpop.f32.mrf.mxu0
  %v443 = vadd.f32 0.0, %v442
  %444 = vmatmul.f32.gmra.mxu0 %v333
  %v445 = vpop.f32.mrf.mxu0
  %v446 = vadd.f32 0.0, %v445
  %447 = vmatmul.f32.gmra.mxu0 %v336
  %v448 = vpop.f32.mrf.mxu0
  %v449 = vadd.f32 0.0, %v448
  %450 = vmatmul.f32.gmra.mxu0 %v339
  %v451 = vpop.f32.mrf.mxu0
  %v452 = vadd.f32 0.0, %v451
  %453 = vmatmul.f32.gmra.mxu0 %v342
  %v454 = vpop.f32.mrf.mxu0
  %v455 = vadd.f32 0.0, %v454
  %456 = vmatmul.f32.gmra.mxu0 %v345
  %v457 = vpop.f32.mrf.mxu0
  %v458 = vadd.f32 0.0, %v457
  %459 = vmatmul.f32.gmra.mxu0 %v348
  %v460 = vpop.f32.mrf.mxu0
  %v461 = vadd.f32 0.0, %v460
  %462 = vmatmul.f32.gmra.mxu0 %v351
  %v463 = vpop.f32.mrf.mxu0
  %v464 = vadd.f32 0.0, %v463
  %465 = vmatmul.f32.gmra.mxu0 %v354
  %v466 = vpop.f32.mrf.mxu0
  %v467 = vadd.f32 0.0, %v466
  %468 = vmatmul.f32.gmra.mxu0 %v357
  %v469 = vpop.f32.mrf.mxu0
  %v470 = vadd.f32 0.0, %v469
  %471 = vmatmul.f32.gmra.mxu0 %v360
  %v472 = vpop.f32.mrf.mxu0
  %v473 = vadd.f32 0.0, %v472
  %474 = vmatmul.f32.gmra.mxu0 %v363
  %v475 = vpop.f32.mrf.mxu0
  %v476 = vadd.f32 0.0, %v475
  %477 = vmatmul.f32.gmra.mxu0 %v366
  %v478 = vpop.f32.mrf.mxu0
  %v479 = vadd.f32 0.0, %v478
  %480 = vmatmul.f32.gmra.mxu0 %v369
  %v481 = vpop.f32.mrf.mxu0
  %v482 = vadd.f32 0.0, %v481
  %483 = vmatmul.f32.gmra.mxu0 %v372
  %v484 = vpop.f32.mrf.mxu0
  %v485 = vadd.f32 0.0, %v484
  %486 = vmatmul.f32.gmra.mxu0 %v375
  %v487 = vpop.f32.mrf.mxu0
  %v488 = vadd.f32 0.0, %v487
  %489 = vmatmul.f32.gmra.mxu0 %v378
  %v490 = vpop.f32.mrf.mxu0
  %v491 = vadd.f32 0.0, %v490
  %492 = vmatmul.f32.gmra.mxu0 %v381
  %v493 = vpop.f32.mrf.mxu0
  %v494 = vadd.f32 0.0, %v493
  %495 = vmatmul.f32.gmra.mxu0 %v384
  %v496 = vpop.f32.mrf.mxu0
  %v497 = vadd.f32 0.0, %v496
  %498 = vmatmul.f32.gmra.mxu0 %v387
  %v499 = vpop.f32.mrf.mxu0
  %v500 = vadd.f32 0.0, %v499
  %501 = vmatmul.f32.gmra.mxu0 %v390
  %v502 = vpop.f32.mrf.mxu0
  %v503 = vadd.f32 0.0, %v502
  %504 = vmatmul.f32.gmra.mxu0 %v393
  %v505 = vpop.f32.mrf.mxu0
  %v506 = vadd.f32 0.0, %v505
  %507 = vmatmul.f32.gmra.mxu0 %v396
  %v508 = vpop.f32.mrf.mxu0
  %v509 = vadd.f32 0.0, %v508
  %510 = vmatmul.f32.gmra.mxu0 %v399
  %v511 = vpop.f32.mrf.mxu0
  %v512 = vadd.f32 0.0, %v511
  %513 = vmatmul.f32.gmra.mxu0 %v402
  %v514 = vpop.f32.mrf.mxu0
  %v515 = vadd.f32 0.0, %v514
  %516 = vmatmul.f32.gmra.mxu0 %v405
  %v517 = vpop.f32.mrf.mxu0
  %v518 = vadd.f32 0.0, %v517
  %519 = vmatmul.f32.gmra.mxu0 %v408
  %v520 = vpop.f32.mrf.mxu0
  %v521 = vadd.f32 0.0, %v520
  %522 = vmatmul.f32.gmra.mxu0 %v411
  %v523 = vpop.f32.mrf.mxu0
  %v524 = vadd.f32 0.0, %v523
  %525 = vmatmul.f32.gmra.mxu0 %v414
  %v526 = vpop.f32.mrf.mxu0
  %v527 = vadd.f32 0.0, %v526
  %528 = vmatmul.f32.gmra.mxu0 %v417
  %v529 = vpop.f32.mrf.mxu0
  %v530 = vadd.f32 0.0, %v529
  %531 = vmatmul.f32.gmra.mxu0 %v420
  %v532 = vpop.f32.mrf.mxu0
  %v533 = vadd.f32 0.0, %v532
  %534 = vmatmul.f32.gmra.mxu0 %v423
  %v535 = vpop.f32.mrf.mxu0
  %v536 = vadd.f32 0.0, %v535
  %537 = vdwg.mxu0
  %v538 = vmax.f32 %v443, 0.0
  %v539 = vmax.f32 %v446, 0.0
  %v540 = vmax.f32 %v449, 0.0
  %v541 = vmax.f32 %v452, 0.0
  %v542 = vmax.f32 %v455, 0.0
  %v543 = vmax.f32 %v458, 0.0
  %v544 = vmax.f32 %v461, 0.0
  %v545 = vmax.f32 %v464, 0.0
  %v546 = vmax.f32 %v467, 0.0
  %v547 = vmax.f32 %v470, 0.0
  %v548 = vmax.f32 %v473, 0.0
  %v549 = vmax.f32 %v476, 0.0
  %v550 = vmax.f32 %v479, 0.0
  %v551 = vmax.f32 %v482, 0.0
  %v552 = vmax.f32 %v485, 0.0
  %v553 = vmax.f32 %v488, 0.0
  %v554 = vmax.f32 %v491, 0.0
  %v555 = vmax.f32 %v494, 0.0
  %v556 = vmax.f32 %v497, 0.0
  %v557 = vmax.f32 %v500, 0.0
  %v558 = vmax.f32 %v503, 0.0
  %v559 = vmax.f32 %v506, 0.0
  %v560 = vmax.f32 %v509, 0.0
  %v561 = vmax.f32 %v512, 0.0
  %v562 = vmax.f32 %v515, 0.0
  %v563 = vmax.f32 %v518, 0.0
  %v564 = vmax.f32 %v521, 0.0
  %v565 = vmax.f32 %v524, 0.0
  %v566 = vmax.f32 %v527, 0.0
  %v567 = vmax.f32 %v530, 0.0
  %v568 = vmax.f32 %v533, 0.0
  %v569 = vmax.f32 %v536, 0.0
  %v570 = vld [vmem:[%s2 + $0x8] sm:$0xff]
  %572 = vst [vmem:[#allocation1] ss:$2 sm:$0xff] %v570
  %v573 = vld.sshfl [vmem:[#allocation1] sm:$0xff pattern:$0x75316420]
  %v574 = vld.sshfl [vmem:[#allocation1 + $0x8] sm:$0xff pattern:$0x75316420]
  %577 = vmatpush.msra.mxu0 %v553
  %578 = vmatpush.msra.mxu0 %v552
  %579 = vmatpush.msra.mxu0 %v551
  %580 = vmatpush.msra.mxu0 %v550
  %581 = vmatpush.msra.mxu0 %v549
  %582 = vmatpush.msra.mxu0 %v548
  %583 = vmatpush.msra.mxu0 %v547
  %584 = vmatpush.msra.mxu0 %v546
  %585 = vmatpush.msra.mxu0 %v545
  %586 = vmatpush.msra.mxu0 %v544
  %587 = vmatpush.msra.mxu0 %v543
  %588 = vmatpush.msra.mxu0 %v542
  %589 = vmatpush.msra.mxu0 %v541
  %590 = vmatpush.msra.mxu0 %v540
  %591 = vmatpush.msra.mxu0 %v539
  %592 = vmatpush.msra.mxu0 %v538
  %593 = vmatmul.f32.gmra.mxu0 %v573
  %v594 = vpop.f32.mrf.mxu0
  %v595 = vadd.f32 0.0, %v594
  %596 = vdwg.mxu0
  %597 = vmatpush.msra.mxu0 %v569
  %598 = vmatpush.msra.mxu0 %v568
  %599 = vmatpush.msra.mxu0 %v567
  %600 = vmatpush.msra.mxu0 %v566
  %601 = vmatpush.msra.mxu0 %v565
  %602 = vmatpush.msra.mxu0 %v564
  %603 = vmatpush.msra.mxu0 %v563
  %604 = vmatpush.msra.mxu0 %v562
  %605 = vmatpush.msra.mxu0 %v561
  %606 = vmatpush.msra.mxu0 %v560
  %607 = vmatpush.msra.mxu0 %v559
  %608 = vmatpush.msra.mxu0 %v558
  %609 = vmatpush.msra.mxu0 %v557
  %610 = vmatpush.msra.mxu0 %v556
  %611 = vmatpush.msra.mxu0 %v555
  %612 = vmatpush.msra.mxu0 %v554
  %613 = vmatmul.f32.gmra.mxu0 %v574
  %v614 = vpop.f32.mrf.mxu0
  %v615 = vadd.f32 %v595, %v614
  %616 = vdwg.mxu0
  %618 = vst [vmem:[#allocation1] ss:$2 sm:$0xff] %v296
  %v619 = vld.sshfl [vmem:[#allocation1] sm:$0xff pattern:$0x75316420]
  %v620 = vld.sshfl [vmem:[#allocation1 + $0x8] sm:$0xff pattern:$0x75316420]
  %623 = vmatpush.msra.mxu0 %v279
  %624 = vmatpush.msra.mxu0 %v278
  %625 = vmatpush.msra.mxu0 %v277
  %626 = vmatpush.msra.mxu0 %v276
  %627 = vmatpush.msra.mxu0 %v275
  %628 = vmatpush.msra.mxu0 %v274
  %629 = vmatpush.msra.mxu0 %v273
  %630 = vmatpush.msra.mxu0 %v272
  %631 = vmatpush.msra.mxu0 %v271
  %632 = vmatpush.msra.mxu0 %v270
  %633 = vmatpush.msra.mxu0 %v269
  %634 = vmatpush.msra.mxu0 %v268
  %635 = vmatpush.msra.mxu0 %v267
  %636 = vmatpush.msra.mxu0 %v266
  %637 = vmatpush.msra.mxu0 %v265
  %638 = vmatpush.msra.mxu0 %v264
  %639 = vmatmul.f32.gmra.mxu0 %v619
  %v640 = vpop.f32.mrf.mxu0
  %v641 = vadd.f32 %v615, %v640
  %642 = vdwg.mxu0
  %643 = vmatpush.msra.mxu0 %v295
  %644 = vmatpush.msra.mxu0 %v294
  %645 = vmatpush.msra.mxu0 %v293
  %646 = vmatpush.msra.mxu0 %v292
  %647 = vmatpush.msra.mxu0 %v291
  %648 = vmatpush.msra.mxu0 %v290
  %649 = vmatpush.msra.mxu0 %v289
  %650 = vmatpush.msra.mxu0 %v288
  %651 = vmatpush.msra.mxu0 %v287
  %652 = vmatpush.msra.mxu0 %v286
  %653 = vmatpush.msra.mxu0 %v285
  %654 = vmatpush.msra.mxu0 %v284
  %655 = vmatpush.msra.mxu0 %v283
  %656 = vmatpush.msra.mxu0 %v282
  %657 = vmatpush.msra.mxu0 %v281
  %658 = vmatpush.msra.mxu0 %v280
  %659 = vmatmul.f32.gmra.mxu0 %v620
  %v660 = vpop.f32.mrf.mxu0
  %v661 = vadd.f32 %v641, %v660
  %662 = vdwg.mxu0
  %v663 = vld [vmem:[%s1 + $0x200] sm:$0xff]
  %v664 = vld [vmem:[%s1 + $0x208] sm:$0xff]
  %v665 = vld [vmem:[%s1 + $0x210] sm:$0xff]
  %v666 = vld [vmem:[%s1 + $0x218] sm:$0xff]
  %v667 = vld [vmem:[%s1 + $0x220] sm:$0xff]
  %v668 = vld [vmem:[%s1 + $0x228] sm:$0xff]
  %v669 = vld [vmem:[%s1 + $0x230] sm:$0xff]
  %v670 = vld [vmem:[%s1 + $0x238] sm:$0xff]
  %v671 = vld [vmem:[%s1 + $0x240] sm:$0xff]
  %v672 = vld [vmem:[%s1 + $0x248] sm:$0xff]
  %v673 = vld [vmem:[%s1 + $0x250] sm:$0xff]
  %v674 = vld [vmem:[%s1 + $0x258] sm:$0xff]
  %v675 = vld [vmem:[%s1 + $0x260] sm:$0xff]
  %v676 = vld [vmem:[%s1 + $0x268] sm:$0xff]
  %v677 = vld [vmem:[%s1 + $0x270] sm:$0xff]
  %v678 = vld [vmem:[%s1 + $0x278] sm:$0xff]
  %v679 = vld [vmem:[%s1 + $0x280] sm:$0xff]
  %v680 = vld [vmem:[%s1 + $0x288] sm:$0xff]
  %v681 = vld [vmem:[%s1 + $0x290] sm:$0xff]
  %v682 = vld [vmem:[%s1 + $0x298] sm:$0xff]
  %v683 = vld [vmem:[%s1 + $0x2a0] sm:$0xff]
  %v684 = vld [vmem:[%s1 + $0x2a8] sm:$0xff]
  %v685 = vld [vmem:[%s1 + $0x2b0] sm:$0xff]
  %v686 = vld [vmem:[%s1 + $0x2b8] sm:$0xff]
  %v687 = vld [vmem:[%s1 + $0x2c0] sm:$0xff]
  %v688 = vld [vmem:[%s1 + $0x2c8] sm:$0xff]
  %v689 = vld [vmem:[%s1 + $0x2d0] sm:$0xff]
  %v690 = vld [vmem:[%s1 + $0x2d8] sm:$0xff]
  %v691 = vld [vmem:[%s1 + $0x2e0] sm:$0xff]
  %v692 = vld [vmem:[%s1 + $0x2e8] sm:$0xff]
  %v693 = vld [vmem:[%s1 + $0x2f0] sm:$0xff]
  %v694 = vld [vmem:[%s1 + $0x2f8] sm:$0xff]
  %v696 = vsel %vm50, %v663, 0
  %v699 = vsel %vm50, %v664, 0
  %v702 = vsel %vm50, %v665, 0
  %v705 = vsel %vm50, %v666, 0
  %v708 = vsel %vm50, %v667, 0
  %v711 = vsel %vm50, %v668, 0
  %v714 = vsel %vm50, %v669, 0
  %v717 = vsel %vm50, %v670, 0
  %v720 = vsel %vm50, %v671, 0
  %v723 = vsel %vm50, %v672, 0
  %v726 = vsel %vm50, %v673, 0
  %v729 = vsel %vm50, %v674, 0
  %v732 = vsel %vm50, %v675, 0
  %v735 = vsel %vm50, %v676, 0
  %v738 = vsel %vm50, %v677, 0
  %v741 = vsel %vm50, %v678, 0
  %v744 = vsel %vm50, %v679, 0
  %v747 = vsel %vm50, %v680, 0
  %v750 = vsel %vm50, %v681, 0
  %v753 = vsel %vm50, %v682, 0
  %v756 = vsel %vm50, %v683, 0
  %v759 = vsel %vm50, %v684, 0
  %v762 = vsel %vm50, %v685, 0
  %v765 = vsel %vm50, %v686, 0
  %v768 = vsel %vm50, %v687, 0
  %v771 = vsel %vm50, %v688, 0
  %v774 = vsel %vm50, %v689, 0
  %v777 = vsel %vm50, %v690, 0
  %v780 = vsel %vm50, %v691, 0
  %v783 = vsel %vm50, %v692, 0
  %v786 = vsel %vm50, %v693, 0
  %v789 = vsel %vm50, %v694, 0
  %791 = vmatpush.msra.mxu0 0.0
  %792 = vmatpush.msra.mxu0 0.0
  %793 = vmatpush.msra.mxu0 0.0
  %794 = vmatpush.msra.mxu0 0.0
  %795 = vmatpush.msra.mxu0 0.0
  %796 = vmatpush.msra.mxu0 0.0
  %797 = vmatpush.msra.mxu0 0.0
  %798 = vmatpush.msra.mxu0 0.0
  %799 = vmatpush.msra.mxu0 0.0
  %800 = vmatpush.msra.mxu0 0.0
  %801 = vmatpush.msra.mxu0 0.0
  %802 = vmatpush.msra.mxu0 0.0
  %803 = vmatpush.msra.mxu0 0.0
  %804 = vmatpush.msra.mxu0 0.0
  %805 = vmatpush.msra.mxu0 0.0
  %806 = vmatpush.msra.mxu0 %v149
  %807 = vmatmul.f32.gmra.mxu0 %v696
  %v808 = vpop.f32.mrf.mxu0
  %v809 = vadd.f32 0.0, %v808
  %810 = vmatmul.f32.gmra.mxu0 %v699
  %v811 = vpop.f32.mrf.mxu0
  %v812 = vadd.f32 0.0, %v811
  %813 = vmatmul.f32.gmra.mxu0 %v702
  %v814 = vpop.f32.mrf.mxu0
  %v815 = vadd.f32 0.0, %v814
  %816 = vmatmul.f32.gmra.mxu0 %v705
  %v817 = vpop.f32.mrf.mxu0
  %v818 = vadd.f32 0.0, %v817
  %819 = vmatmul.f32.gmra.mxu0 %v708
  %v820 = vpop.f32.mrf.mxu0
  %v821 = vadd.f32 0.0, %v820
  %822 = vmatmul.f32.gmra.mxu0 %v711
  %v823 = vpop.f32.mrf.mxu0
  %v824 = vadd.f32 0.0, %v823
  %825 = vmatmul.f32.gmra.mxu0 %v714
  %v826 = vpop.f32.mrf.mxu0
  %v827 = vadd.f32 0.0, %v826
  %828 = vmatmul.f32.gmra.mxu0 %v717
  %v829 = vpop.f32.mrf.mxu0
  %v830 = vadd.f32 0.0, %v829
  %831 = vmatmul.f32.gmra.mxu0 %v720
  %v832 = vpop.f32.mrf.mxu0
  %v833 = vadd.f32 0.0, %v832
  %834 = vmatmul.f32.gmra.mxu0 %v723
  %v835 = vpop.f32.mrf.mxu0
  %v836 = vadd.f32 0.0, %v835
  %837 = vmatmul.f32.gmra.mxu0 %v726
  %v838 = vpop.f32.mrf.mxu0
  %v839 = vadd.f32 0.0, %v838
  %840 = vmatmul.f32.gmra.mxu0 %v729
  %v841 = vpop.f32.mrf.mxu0
  %v842 = vadd.f32 0.0, %v841
  %843 = vmatmul.f32.gmra.mxu0 %v732
  %v844 = vpop.f32.mrf.mxu0
  %v845 = vadd.f32 0.0, %v844
  %846 = vmatmul.f32.gmra.mxu0 %v735
  %v847 = vpop.f32.mrf.mxu0
  %v848 = vadd.f32 0.0, %v847
  %849 = vmatmul.f32.gmra.mxu0 %v738
  %v850 = vpop.f32.mrf.mxu0
  %v851 = vadd.f32 0.0, %v850
  %852 = vmatmul.f32.gmra.mxu0 %v741
  %v853 = vpop.f32.mrf.mxu0
  %v854 = vadd.f32 0.0, %v853
  %855 = vmatmul.f32.gmra.mxu0 %v744
  %v856 = vpop.f32.mrf.mxu0
  %v857 = vadd.f32 0.0, %v856
  %858 = vmatmul.f32.gmra.mxu0 %v747
  %v859 = vpop.f32.mrf.mxu0
  %v860 = vadd.f32 0.0, %v859
  %861 = vmatmul.f32.gmra.mxu0 %v750
  %v862 = vpop.f32.mrf.mxu0
  %v863 = vadd.f32 0.0, %v862
  %864 = vmatmul.f32.gmra.mxu0 %v753
  %v865 = vpop.f32.mrf.mxu0
  %v866 = vadd.f32 0.0, %v865
  %867 = vmatmul.f32.gmra.mxu0 %v756
  %v868 = vpop.f32.mrf.mxu0
  %v869 = vadd.f32 0.0, %v868
  %870 = vmatmul.f32.gmra.mxu0 %v759
  %v871 = vpop.f32.mrf.mxu0
  %v872 = vadd.f32 0.0, %v871
  %873 = vmatmul.f32.gmra.mxu0 %v762
  %v874 = vpop.f32.mrf.mxu0
  %v875 = vadd.f32 0.0, %v874
  %876 = vmatmul.f32.gmra.mxu0 %v765
  %v877 = vpop.f32.mrf.mxu0
  %v878 = vadd.f32 0.0, %v877
  %879 = vmatmul.f32.gmra.mxu0 %v768
  %v880 = vpop.f32.mrf.mxu0
  %v881 = vadd.f32 0.0, %v880
  %882 = vmatmul.f32.gmra.mxu0 %v771
  %v883 = vpop.f32.mrf.mxu0
  %v884 = vadd.f32 0.0, %v883
  %885 = vmatmul.f32.gmra.mxu0 %v774
  %v886 = vpop.f32.mrf.mxu0
  %v887 = vadd.f32 0.0, %v886
  %888 = vmatmul.f32.gmra.mxu0 %v777
  %v889 = vpop.f32.mrf.mxu0
  %v890 = vadd.f32 0.0, %v889
  %891 = vmatmul.f32.gmra.mxu0 %v780
  %v892 = vpop.f32.mrf.mxu0
  %v893 = vadd.f32 0.0, %v892
  %894 = vmatmul.f32.gmra.mxu0 %v783
  %v895 = vpop.f32.mrf.mxu0
  %v896 = vadd.f32 0.0, %v895
  %897 = vmatmul.f32.gmra.mxu0 %v786
  %v898 = vpop.f32.mrf.mxu0
  %v899 = vadd.f32 0.0, %v898
  %900 = vmatmul.f32.gmra.mxu0 %v789
  %v901 = vpop.f32.mrf.mxu0
  %v902 = vadd.f32 0.0, %v901
  %903 = vdwg.mxu0
  %v904 = vmax.f32 %v809, 0.0
  %v905 = vmax.f32 %v812, 0.0
  %v906 = vmax.f32 %v815, 0.0
  %v907 = vmax.f32 %v818, 0.0
  %v908 = vmax.f32 %v821, 0.0
  %v909 = vmax.f32 %v824, 0.0
  %v910 = vmax.f32 %v827, 0.0
  %v911 = vmax.f32 %v830, 0.0
  %v912 = vmax.f32 %v833, 0.0
  %v913 = vmax.f32 %v836, 0.0
  %v914 = vmax.f32 %v839, 0.0
  %v915 = vmax.f32 %v842, 0.0
  %v916 = vmax.f32 %v845, 0.0
  %v917 = vmax.f32 %v848, 0.0
  %v918 = vmax.f32 %v851, 0.0
  %v919 = vmax.f32 %v854, 0.0
  %v920 = vmax.f32 %v857, 0.0
  %v921 = vmax.f32 %v860, 0.0
  %v922 = vmax.f32 %v863, 0.0
  %v923 = vmax.f32 %v866, 0.0
  %v924 = vmax.f32 %v869, 0.0
  %v925 = vmax.f32 %v872, 0.0
  %v926 = vmax.f32 %v875, 0.0
  %v927 = vmax.f32 %v878, 0.0
  %v928 = vmax.f32 %v881, 0.0
  %v929 = vmax.f32 %v884, 0.0
  %v930 = vmax.f32 %v887, 0.0
  %v931 = vmax.f32 %v890, 0.0
  %v932 = vmax.f32 %v893, 0.0
  %v933 = vmax.f32 %v896, 0.0
  %v934 = vmax.f32 %v899, 0.0
  %v935 = vmax.f32 %v902, 0.0
  %v936 = vld [vmem:[%s2 + $0x10] sm:$0xff]
  %938 = vst [vmem:[#allocation1] ss:$2 sm:$0xff] %v936
  %v939 = vld.sshfl [vmem:[#allocation1] sm:$0xff pattern:$0x75316420]
  %v940 = vld.sshfl [vmem:[#allocation1 + $0x8] sm:$0xff pattern:$0x75316420]
  %943 = vmatpush.msra.mxu0 %v919
  %944 = vmatpush.msra.mxu0 %v918
  %945 = vmatpush.msra.mxu0 %v917
  %946 = vmatpush.msra.mxu0 %v916
  %947 = vmatpush.msra.mxu0 %v915
  %948 = vmatpush.msra.mxu0 %v914
  %949 = vmatpush.msra.mxu0 %v913
  %950 = vmatpush.msra.mxu0 %v912
  %951 = vmatpush.msra.mxu0 %v911
  %952 = vmatpush.msra.mxu0 %v910
  %953 = vmatpush.msra.mxu0 %v909
  %954 = vmatpush.msra.mxu0 %v908
  %955 = vmatpush.msra.mxu0 %v907
  %956 = vmatpush.msra.mxu0 %v906
  %957 = vmatpush.msra.mxu0 %v905
  %958 = vmatpush.msra.mxu0 %v904
  %959 = vmatmul.f32.gmra.mxu0 %v939
  %v960 = vpop.f32.mrf.mxu0
  %v961 = vadd.f32 0.0, %v960
  %962 = vdwg.mxu0
  %963 = vmatpush.msra.mxu0 %v935
  %964 = vmatpush.msra.mxu0 %v934
  %965 = vmatpush.msra.mxu0 %v933
  %966 = vmatpush.msra.mxu0 %v932
  %967 = vmatpush.msra.mxu0 %v931
  %968 = vmatpush.msra.mxu0 %v930
  %969 = vmatpush.msra.mxu0 %v929
  %970 = vmatpush.msra.mxu0 %v928
  %971 = vmatpush.msra.mxu0 %v927
  %972 = vmatpush.msra.mxu0 %v926
  %973 = vmatpush.msra.mxu0 %v925
  %974 = vmatpush.msra.mxu0 %v924
  %975 = vmatpush.msra.mxu0 %v923
  %976 = vmatpush.msra.mxu0 %v922
  %977 = vmatpush.msra.mxu0 %v921
  %978 = vmatpush.msra.mxu0 %v920
  %979 = vmatmul.f32.gmra.mxu0 %v940
  %v980 = vpop.f32.mrf.mxu0
  %v981 = vadd.f32 %v961, %v980
  %982 = vdwg.mxu0
  %v983 = vadd.f32 %v661, %v981
  %v984 = vld [vmem:[%s1 + $0x300] sm:$0xff]
  %v985 = vld [vmem:[%s1 + $0x308] sm:$0xff]
  %v986 = vld [vmem:[%s1 + $0x310] sm:$0xff]
  %v987 = vld [vmem:[%s1 + $0x318] sm:$0xff]
  %v988 = vld [vmem:[%s1 + $0x320] sm:$0xff]
  %v989 = vld [vmem:[%s1 + $0x328] sm:$0xff]
  %v990 = vld [vmem:[%s1 + $0x330] sm:$0xff]
  %v991 = vld [vmem:[%s1 + $0x338] sm:$0xff]
  %v992 = vld [vmem:[%s1 + $0x340] sm:$0xff]
  %v993 = vld [vmem:[%s1 + $0x348] sm:$0xff]
  %v994 = vld [vmem:[%s1 + $0x350] sm:$0xff]
  %v995 = vld [vmem:[%s1 + $0x358] sm:$0xff]
  %v996 = vld [vmem:[%s1 + $0x360] sm:$0xff]
  %v997 = vld [vmem:[%s1 + $0x368] sm:$0xff]
  %v998 = vld [vmem:[%s1 + $0x370] sm:$0xff]
  %v999 = vld [vmem:[%s1 + $0x378] sm:$0xff]
  %v1000 = vld [vmem:[%s1 + $0x380] sm:$0xff]
  %v1001 = vld [vmem:[%s1 + $0x388] sm:$0xff]
  %v1002 = vld [vmem:[%s1 + $0x390] sm:$0xff]
  %v1003 = vld [vmem:[%s1 + $0x398] sm:$0xff]
  %v1004 = vld [vmem:[%s1 + $0x3a0] sm:$0xff]
  %v1005 = vld [vmem:[%s1 + $0x3a8] sm:$0xff]
  %v1006 = vld [vmem:[%s1 + $0x3b0] sm:$0xff]
  %v1007 = vld [vmem:[%s1 + $0x3b8] sm:$0xff]
  %v1008 = vld [vmem:[%s1 + $0x3c0] sm:$0xff]
  %v1009 = vld [vmem:[%s1 + $0x3c8] sm:$0xff]
  %v1010 = vld [vmem:[%s1 + $0x3d0] sm:$0xff]
  %v1011 = vld [vmem:[%s1 + $0x3d8] sm:$0xff]
  %v1012 = vld [vmem:[%s1 + $0x3e0] sm:$0xff]
  %v1013 = vld [vmem:[%s1 + $0x3e8] sm:$0xff]
  %v1014 = vld [vmem:[%s1 + $0x3f0] sm:$0xff]
  %v1015 = vld [vmem:[%s1 + $0x3f8] sm:$0xff]
  %v1017 = vsel %vm50, %v984, 0
  %v1020 = vsel %vm50, %v985, 0
  %v1023 = vsel %vm50, %v986, 0
  %v1026 = vsel %vm50, %v987, 0
  %v1029 = vsel %vm50, %v988, 0
  %v1032 = vsel %vm50, %v989, 0
  %v1035 = vsel %vm50, %v990, 0
  %v1038 = vsel %vm50, %v991, 0
  %v1041 = vsel %vm50, %v992, 0
  %v1044 = vsel %vm50, %v993, 0
  %v1047 = vsel %vm50, %v994, 0
  %v1050 = vsel %vm50, %v995, 0
  %v1053 = vsel %vm50, %v996, 0
  %v1056 = vsel %vm50, %v997, 0
  %v1059 = vsel %vm50, %v998, 0
  %v1062 = vsel %vm50, %v999, 0
  %v1065 = vsel %vm50, %v1000, 0
  %v1068 = vsel %vm50, %v1001, 0
  %v1071 = vsel %vm50, %v1002, 0
  %v1074 = vsel %vm50, %v1003, 0
  %v1077 = vsel %vm50, %v1004, 0
  %v1080 = vsel %vm50, %v1005, 0
  %v1083 = vsel %vm50, %v1006, 0
  %v1086 = vsel %vm50, %v1007, 0
  %v1089 = vsel %vm50, %v1008, 0
  %v1092 = vsel %vm50, %v1009, 0
  %v1095 = vsel %vm50, %v1010, 0
  %v1098 = vsel %vm50, %v1011, 0
  %v1101 = vsel %vm50, %v1012, 0
  %v1104 = vsel %vm50, %v1013, 0
  %v1107 = vsel %vm50, %v1014, 0
  %v1110 = vsel %vm50, %v1015, 0
  %1112 = vmatpush.msra.mxu0 0.0
  %1113 = vmatpush.msra.mxu0 0.0
  %1114 = vmatpush.msra.mxu0 0.0
  %1115 = vmatpush.msra.mxu0 0.0
  %1116 = vmatpush.msra.mxu0 0.0
  %1117 = vmatpush.msra.mxu0 0.0
  %1118 = vmatpush.msra.mxu0 0.0
  %1119 = vmatpush.msra.mxu0 0.0
  %1120 = vmatpush.msra.mxu0 0.0
  %1121 = vmatpush.msra.mxu0 0.0
  %1122 = vmatpush.msra.mxu0 0.0
  %1123 = vmatpush.msra.mxu0 0.0
  %1124 = vmatpush.msra.mxu0 0.0
  %1125 = vmatpush.msra.mxu0 0.0
  %1126 = vmatpush.msra.mxu0 0.0
  %1127 = vmatpush.msra.mxu0 %v149
  %1128 = vmatmul.f32.gmra.mxu0 %v1017
  %v1129 = vpop.f32.mrf.mxu0
  %v1130 = vadd.f32 0.0, %v1129
  %1131 = vmatmul.f32.gmra.mxu0 %v1020
  %v1132 = vpop.f32.mrf.mxu0
  %v1133 = vadd.f32 0.0, %v1132
  %1134 = vmatmul.f32.gmra.mxu0 %v1023
  %v1135 = vpop.f32.mrf.mxu0
  %v1136 = vadd.f32 0.0, %v1135
  %1137 = vmatmul.f32.gmra.mxu0 %v1026
  %v1138 = vpop.f32.mrf.mxu0
  %v1139 = vadd.f32 0.0, %v1138
  %1140 = vmatmul.f32.gmra.mxu0 %v1029
  %v1141 = vpop.f32.mrf.mxu0
  %v1142 = vadd.f32 0.0, %v1141
  %1143 = vmatmul.f32.gmra.mxu0 %v1032
  %v1144 = vpop.f32.mrf.mxu0
  %v1145 = vadd.f32 0.0, %v1144
  %1146 = vmatmul.f32.gmra.mxu0 %v1035
  %v1147 = vpop.f32.mrf.mxu0
  %v1148 = vadd.f32 0.0, %v1147
  %1149 = vmatmul.f32.gmra.mxu0 %v1038
  %v1150 = vpop.f32.mrf.mxu0
  %v1151 = vadd.f32 0.0, %v1150
  %1152 = vmatmul.f32.gmra.mxu0 %v1041
  %v1153 = vpop.f32.mrf.mxu0
  %v1154 = vadd.f32 0.0, %v1153
  %1155 = vmatmul.f32.gmra.mxu0 %v1044
  %v1156 = vpop.f32.mrf.mxu0
  %v1157 = vadd.f32 0.0, %v1156
  %1158 = vmatmul.f32.gmra.mxu0 %v1047
  %v1159 = vpop.f32.mrf.mxu0
  %v1160 = vadd.f32 0.0, %v1159
  %1161 = vmatmul.f32.gmra.mxu0 %v1050
  %v1162 = vpop.f32.mrf.mxu0
  %v1163 = vadd.f32 0.0, %v1162
  %1164 = vmatmul.f32.gmra.mxu0 %v1053
  %v1165 = vpop.f32.mrf.mxu0
  %v1166 = vadd.f32 0.0, %v1165
  %1167 = vmatmul.f32.gmra.mxu0 %v1056
  %v1168 = vpop.f32.mrf.mxu0
  %v1169 = vadd.f32 0.0, %v1168
  %1170 = vmatmul.f32.gmra.mxu0 %v1059
  %v1171 = vpop.f32.mrf.mxu0
  %v1172 = vadd.f32 0.0, %v1171
  %1173 = vmatmul.f32.gmra.mxu0 %v1062
  %v1174 = vpop.f32.mrf.mxu0
  %v1175 = vadd.f32 0.0, %v1174
  %1176 = vmatmul.f32.gmra.mxu0 %v1065
  %v1177 = vpop.f32.mrf.mxu0
  %v1178 = vadd.f32 0.0, %v1177
  %1179 = vmatmul.f32.gmra.mxu0 %v1068
  %v1180 = vpop.f32.mrf.mxu0
  %v1181 = vadd.f32 0.0, %v1180
  %1182 = vmatmul.f32.gmra.mxu0 %v1071
  %v1183 = vpop.f32.mrf.mxu0
  %v1184 = vadd.f32 0.0, %v1183
  %1185 = vmatmul.f32.gmra.mxu0 %v1074
  %v1186 = vpop.f32.mrf.mxu0
  %v1187 = vadd.f32 0.0, %v1186
  %1188 = vmatmul.f32.gmra.mxu0 %v1077
  %v1189 = vpop.f32.mrf.mxu0
  %v1190 = vadd.f32 0.0, %v1189
  %1191 = vmatmul.f32.gmra.mxu0 %v1080
  %v1192 = vpop.f32.mrf.mxu0
  %v1193 = vadd.f32 0.0, %v1192
  %1194 = vmatmul.f32.gmra.mxu0 %v1083
  %v1195 = vpop.f32.mrf.mxu0
  %v1196 = vadd.f32 0.0, %v1195
  %1197 = vmatmul.f32.gmra.mxu0 %v1086
  %v1198 = vpop.f32.mrf.mxu0
  %v1199 = vadd.f32 0.0, %v1198
  %1200 = vmatmul.f32.gmra.mxu0 %v1089
  %v1201 = vpop.f32.mrf.mxu0
  %v1202 = vadd.f32 0.0, %v1201
  %1203 = vmatmul.f32.gmra.mxu0 %v1092
  %v1204 = vpop.f32.mrf.mxu0
  %v1205 = vadd.f32 0.0, %v1204
  %1206 = vmatmul.f32.gmra.mxu0 %v1095
  %v1207 = vpop.f32.mrf.mxu0
  %v1208 = vadd.f32 0.0, %v1207
  %1209 = vmatmul.f32.gmra.mxu0 %v1098
  %v1210 = vpop.f32.mrf.mxu0
  %v1211 = vadd.f32 0.0, %v1210
  %1212 = vmatmul.f32.gmra.mxu0 %v1101
  %v1213 = vpop.f32.mrf.mxu0
  %v1214 = vadd.f32 0.0, %v1213
  %1215 = vmatmul.f32.gmra.mxu0 %v1104
  %v1216 = vpop.f32.mrf.mxu0
  %v1217 = vadd.f32 0.0, %v1216
  %1218 = vmatmul.f32.gmra.mxu0 %v1107
  %v1219 = vpop.f32.mrf.mxu0
  %v1220 = vadd.f32 0.0, %v1219
  %1221 = vmatmul.f32.gmra.mxu0 %v1110
  %v1222 = vpop.f32.mrf.mxu0
  %v1223 = vadd.f32 0.0, %v1222
  %1224 = vdwg.mxu0
  %v1225 = vmax.f32 %v1130, 0.0
  %v1226 = vmax.f32 %v1133, 0.0
  %v1227 = vmax.f32 %v1136, 0.0
  %v1228 = vmax.f32 %v1139, 0.0
  %v1229 = vmax.f32 %v1142, 0.0
  %v1230 = vmax.f32 %v1145, 0.0
  %v1231 = vmax.f32 %v1148, 0.0
  %v1232 = vmax.f32 %v1151, 0.0
  %v1233 = vmax.f32 %v1154, 0.0
  %v1234 = vmax.f32 %v1157, 0.0
  %v1235 = vmax.f32 %v1160, 0.0
  %v1236 = vmax.f32 %v1163, 0.0
  %v1237 = vmax.f32 %v1166, 0.0
  %v1238 = vmax.f32 %v1169, 0.0
  %v1239 = vmax.f32 %v1172, 0.0
  %v1240 = vmax.f32 %v1175, 0.0
  %v1241 = vmax.f32 %v1178, 0.0
  %v1242 = vmax.f32 %v1181, 0.0
  %v1243 = vmax.f32 %v1184, 0.0
  %v1244 = vmax.f32 %v1187, 0.0
  %v1245 = vmax.f32 %v1190, 0.0
  %v1246 = vmax.f32 %v1193, 0.0
  %v1247 = vmax.f32 %v1196, 0.0
  %v1248 = vmax.f32 %v1199, 0.0
  %v1249 = vmax.f32 %v1202, 0.0
  %v1250 = vmax.f32 %v1205, 0.0
  %v1251 = vmax.f32 %v1208, 0.0
  %v1252 = vmax.f32 %v1211, 0.0
  %v1253 = vmax.f32 %v1214, 0.0
  %v1254 = vmax.f32 %v1217, 0.0
  %v1255 = vmax.f32 %v1220, 0.0
  %v1256 = vmax.f32 %v1223, 0.0
  %v1257 = vld [vmem:[%s2 + $0x18] sm:$0xff]
  %1259 = vst [vmem:[#allocation1] ss:$2 sm:$0xff] %v1257
  %v1260 = vld.sshfl [vmem:[#allocation1] sm:$0xff pattern:$0x75316420]
  %v1261 = vld.sshfl [vmem:[#allocation1 + $0x8] sm:$0xff pattern:$0x75316420]
  %1264 = vmatpush.msra.mxu0 %v1240
  %1265 = vmatpush.msra.mxu0 %v1239
  %1266 = vmatpush.msra.mxu0 %v1238
  %1267 = vmatpush.msra.mxu0 %v1237
  %1268 = vmatpush.msra.mxu0 %v1236
  %1269 = vmatpush.msra.mxu0 %v1235
  %1270 = vmatpush.msra.mxu0 %v1234
  %1271 = vmatpush.msra.mxu0 %v1233
  %1272 = vmatpush.msra.mxu0 %v1232
  %1273 = vmatpush.msra.mxu0 %v1231
  %1274 = vmatpush.msra.mxu0 %v1230
  %1275 = vmatpush.msra.mxu0 %v1229
  %1276 = vmatpush.msra.mxu0 %v1228
  %1277 = vmatpush.msra.mxu0 %v1227
  %1278 = vmatpush.msra.mxu0 %v1226
  %1279 = vmatpush.msra.mxu0 %v1225
  %1280 = vmatmul.f32.gmra.mxu0 %v1260
  %v1281 = vpop.f32.mrf.mxu0
  %v1282 = vadd.f32 0.0, %v1281
  %1283 = vdwg.mxu0
  %1284 = vmatpush.msra.mxu0 %v1256
  %1285 = vmatpush.msra.mxu0 %v1255
  %1286 = vmatpush.msra.mxu0 %v1254
  %1287 = vmatpush.msra.mxu0 %v1253
  %1288 = vmatpush.msra.mxu0 %v1252
  %1289 = vmatpush.msra.mxu0 %v1251
  %1290 = vmatpush.msra.mxu0 %v1250
  %1291 = vmatpush.msra.mxu0 %v1249
  %1292 = vmatpush.msra.mxu0 %v1248
  %1293 = vmatpush.msra.mxu0 %v1247
  %1294 = vmatpush.msra.mxu0 %v1246
  %1295 = vmatpush.msra.mxu0 %v1245
  %1296 = vmatpush.msra.mxu0 %v1244
  %1297 = vmatpush.msra.mxu0 %v1243
  %1298 = vmatpush.msra.mxu0 %v1242
  %1299 = vmatpush.msra.mxu0 %v1241
  %1300 = vmatmul.f32.gmra.mxu0 %v1261
  %v1301 = vpop.f32.mrf.mxu0
  %v1302 = vadd.f32 %v1282, %v1301
  %1303 = vdwg.mxu0
  %v1304 = vadd.f32 %v983, %v1302
  %v1305 = vld [vmem:[%s3] sm:$0xf]
  %1307 = vset.pattern.permute.xlu0 0
  %1308 = vperm.xlu0 %1307, %v1305
  %v1309 = vpop.permute.xlu0 %1308
  %v1311 = vadd.f32 %v1304, %v1309
  %1312 = vst [vmem:[%s4] sm:$0xf] %v1311
  // Predicated region
  $region18: #{dummy_mlp_forward.1} parent=0 // pred_check
    _
  $region19: #{dummy_mlp_forward.1} parent=0 // pred_check_branch
    %1314 = sbr.rel (0) target = $region21
  $region20: #{dummy_mlp_forward.1} parent=0 // pred_region
    _
  $region21: #{dummy_mlp_forward.1} parent=0 // pred_fallthru
    _
  // Predicated region
  $region22: #{dummy_mlp_forward.1} parent=0 // pred_check
    _
  $region23: #{dummy_mlp_forward.1} parent=0 // pred_check_branch
    %1316 = sbr.rel (0) target = $region25
  $region24: #{dummy_mlp_forward.1} parent=0 // pred_region
    _
  $region25: #{dummy_mlp_forward.1} parent=0 // pred_fallthru
    _

</llo_original>
